<compile_context>
chip_gen: v5e
topology: v5e:2x2
jax: 0.10.0
libtpu: 0.0.40
codegen_flags: <defaults>
</compile_context>

<pallas_src>
import jax
import jax.numpy as jnp
from jax.experimental import pallas as pl
from jax.experimental.pallas import tpu as pltpu


def _make_kernel(n_head, batch, seq_len, hidden_size):
    B, S, H = batch, seq_len, hidden_size
    d = H // n_head

    def kernel(x_ref, mask_ref, wqkv_ref, b_ref, wo_ref, out_ref):
        # ---- one dense QKV projection for the whole batch ------------------
        x2 = x_ref[...].reshape(B * S, H)                        # (B*S, H) bf16
        b_qkv = b_ref[:, : 3 * H]                                # (1, 3H) f32 (q part pre-scaled)
        b_out = b_ref[:, 3 * H:]                                 # (1, H)  f32

        qkv = jnp.dot(x2, wqkv_ref[...],
                      preferred_element_type=jnp.float32) + b_qkv   # (B*S, 3H) f32

        mask_all = mask_ref[...]                                 # (B, S) f32

        # Static unrolled batch/head loops; at B=2, n_head=4, S=8 every
        # intermediate fits a single (8,128)-padded vreg, so unrolling is safe.
        for b in range(B):
            r0 = b * S
            q = qkv[r0:r0 + S, 0 * H:1 * H]          # (S, H) f32, 1/scale folded
            k = qkv[r0:r0 + S, 1 * H:2 * H]
            v = qkv[r0:r0 + S, 2 * H:3 * H]

            # One K transpose per batch element (instead of per head).
            kt = jnp.transpose(k).astype(jnp.bfloat16)           # (H, S)
            qb = q.astype(jnp.bfloat16)
            vb = v.astype(jnp.bfloat16)

            # Hoisted mask broadcast (JAX does not CSE broadcast_in_dim).
            mask_b = jnp.broadcast_to(mask_all[b:b + 1, :], (S, S))   # (S, S)

            ctx_heads = []
            for h in range(n_head):
                c0 = h * d
                scores = jnp.dot(qb[:, c0:c0 + d], kt[c0:c0 + d, :],
                                 preferred_element_type=jnp.float32)  # (S, S)

                # allennlp masked_softmax, fused into one normalization:
                #   softmax(scores*mask) * mask, renormalized (+1e-13)
                #   == (e*mask) / (sum(e*mask) + 1e-13*sum(e))
                # NOTE: the stabilizing max is taken over scores*mask (masked
                # columns pinned to 0) ON PURPOSE -- this reproduces the
                # allennlp semantics exactly; do not "fix" it to a -inf mask.
                masked = scores * mask_b
                m = jnp.max(masked, axis=-1, keepdims=True)
                e = jnp.exp(masked - m)
                em = e * mask_b
                denom = (jnp.sum(em, axis=-1, keepdims=True)
                         + 1e-13 * jnp.sum(e, axis=-1, keepdims=True))
                p = em * pl.reciprocal(denom, approx=True)

                # TODO(synk): attention dropout is identity (eval mode).
                ctx_heads.append(jnp.dot(p.astype(jnp.bfloat16), vb[:, c0:c0 + d],
                                         preferred_element_type=jnp.float32))

            # Lane slab of all heads -> ONE dense (S,H)@(H,H) out-projection.
            ctx = jnp.concatenate(ctx_heads, axis=-1).astype(jnp.bfloat16)   # (S, H)
            out_b = jnp.dot(ctx, wo_ref[...],
                            preferred_element_type=jnp.float32) + b_out
            out_ref[b] = out_b.astype(out_ref.dtype)

    return kernel


def self_attention2(x, mask, w_comb, b_comb, w_out, b_out, *, n_head):
    B, S, H = x.shape
    d = H // n_head
    scale = float(d) ** 0.5
    cdt = jnp.bfloat16

    # ---- wrapper-side weight prep (done once per model) --------------------
    # Fold 1/scale into the Q columns of the combined projection and its bias.
    col_scale = jnp.concatenate([jnp.full((H,), 1.0 / scale, jnp.float32),
                                 jnp.ones((2 * H,), jnp.float32)])
    w_qkv = (w_comb.astype(jnp.float32) * col_scale[None, :]).astype(cdt)    # (H, 3H)
    b_all = jnp.concatenate([b_comb[0].astype(jnp.float32) * col_scale,
                             b_out[0].astype(jnp.float32)])[None, :]         # (1, 4H) f32
    w_o = w_out.astype(cdt)                                                  # (H, H)

    x_c = x.astype(cdt)
    mask_f = mask.astype(jnp.float32)

    kernel = _make_kernel(n_head, B, S, H)

    return pl.pallas_call(
        kernel,
        out_shape=jax.ShapeDtypeStruct((B, S, H), x.dtype),
        grid_spec=pltpu.PrefetchScalarGridSpec(
            num_scalar_prefetch=0,
            grid=(1,),                                   # whole batch in one step
            in_specs=[
                pl.BlockSpec((B, S, H), lambda i: (0, 0, 0)),    # x (bf16)
                pl.BlockSpec((B, S), lambda i: (0, 0)),          # mask (f32)
                pl.BlockSpec((H, 3 * H), lambda i: (0, 0)),      # W_qkv (q-scaled, bf16)
                pl.BlockSpec((1, 4 * H), lambda i: (0, 0)),      # [bq*, bk, bv, bo] (f32)
                pl.BlockSpec((H, H), lambda i: (0, 0)),          # W_out (bf16)
            ],
            out_specs=pl.BlockSpec((B, S, H), lambda i: (0, 0, 0)),
        ),
        compiler_params=pltpu.CompilerParams(
            dimension_semantics=("arbitrary",),
            vmem_limit_bytes=32 * 1024 * 1024),
    )(x_c, mask_f, w_qkv, b_all, w_o)


def reference(x, mask, w_comb, b_comb, w_out, b_out, *, n_head):
    """Pure-JAX f32 reference reproducing the PyTorch forward."""
    B, S, H = x.shape
    d = H // n_head
    scale = float(d) ** 0.5
    qkv = x @ w_comb + b_comb[0]
    q, k, v = qkv[..., :H], qkv[..., H:2 * H], qkv[..., 2 * H:]

    def split_heads(t):  # (B,S,H) -> (B*nh, S, d)
        return t.reshape(B, S, n_head, d).transpose(0, 2, 1, 3).reshape(B * n_head, S, d)

    qh, kh, vh = split_heads(q), split_heads(k), split_heads(v)
    scores = jnp.einsum('bqd,bkd->bqk', qh / scale, kh)
    m = jnp.repeat(mask, n_head, axis=0)[:, None, :]                 # (B*nh,1,S)
    p = jax.nn.softmax(scores * m, axis=-1)
    p = p * m
    p = p / (p.sum(-1, keepdims=True) + 1e-13)
    out = jnp.einsum('bqk,bkd->bqd', p, vh)
    out = out.reshape(B, n_head, S, d).transpose(0, 2, 1, 3).reshape(B, S, H)
    return out @ w_out + b_out[0]


if __name__ == "__main__":
    batch, seq, hidden, n_head = 2, 8, 32, 4

    key = jax.random.PRNGKey(0)
    kx, k1, k2, k3, k4 = jax.random.split(key, 5)

    x = jax.random.normal(kx, (batch, seq, hidden), dtype=jnp.float32)
    mask = jnp.ones((batch, seq), dtype=jnp.float32)
    mask = mask.at[1, 6:].set(0.0)   # exercise the masked_softmax path

    # deterministic "Linear" params (uniform ~ PyTorch default range)
    bound_c = 1.0 / (hidden ** 0.5)
    w_comb = jax.random.uniform(k1, (hidden, 3 * hidden), jnp.float32, -bound_c, bound_c)
    b_comb = jax.random.uniform(k2, (1, 3 * hidden), jnp.float32, -bound_c, bound_c)
    w_out = jax.random.uniform(k3, (hidden, hidden), jnp.float32, -bound_c, bound_c)
    b_out = jax.random.uniform(k4, (1, hidden), jnp.float32, -bound_c, bound_c)

    out = self_attention2(x, mask, w_comb, b_comb, w_out, b_out, n_head=n_head)
    out = jax.block_until_ready(out)

    ref = reference(x, mask, w_comb, b_comb, w_out, b_out, n_head=n_head)
    assert out.shape == (batch, seq, hidden)
    # bf16 MXU operands + approx reciprocal -> compare against the f32
    # reference with a correspondingly relaxed tolerance.
    max_err = jnp.max(jnp.abs(out - ref))
    assert jnp.allclose(out, ref, atol=5e-2, rtol=5e-2), f"max err {max_err}"

    print("KERNEL_OK")
</pallas_src>

<mosaic_0001>
module attributes {stable_mosaic.version = 11 : i64} {
  func.func @kernel(%arg0: i32, %arg1: memref<2x8x32xbf16, #tpu.memory_space<vmem>>, %arg2: memref<2x8xf32, #tpu.memory_space<vmem>>, %arg3: memref<32x96xbf16, #tpu.memory_space<vmem>>, %arg4: memref<1x128xf32, #tpu.memory_space<vmem>>, %arg5: memref<32x32xbf16, #tpu.memory_space<vmem>>, %arg6: memref<2x8x32xf32, #tpu.memory_space<vmem>>) attributes {dimension_semantics = [#tpu.dimension_semantics<arbitrary>], iteration_bounds = array<i64: 1>, scalar_prefetch = 0 : i64, scratch_operands = 0 : i64, tpu.core_type = #tpu.core_type<tc>, window_params = [{pipeline_mode = #tpu.pipeline_mode<synchronous>, transform_indices = @transform_0, window_bounds = array<i64: 2, 8, 32>}, {pipeline_mode = #tpu.pipeline_mode<synchronous>, transform_indices = @transform_1, window_bounds = array<i64: 2, 8>}, {pipeline_mode = #tpu.pipeline_mode<synchronous>, transform_indices = @transform_2, window_bounds = array<i64: 32, 96>}, {pipeline_mode = #tpu.pipeline_mode<synchronous>, transform_indices = @transform_3, window_bounds = array<i64: 1, 128>}, {pipeline_mode = #tpu.pipeline_mode<synchronous>, transform_indices = @transform_4, window_bounds = array<i64: 32, 32>}, {pipeline_mode = #tpu.pipeline_mode<synchronous>, transform_indices = @transform_5, window_bounds = array<i64: 2, 8, 32>}]} {
    %c0 = arith.constant 0 : index
    %c0_0 = arith.constant 0 : index
    %c0_1 = arith.constant 0 : index
    %0 = vector.load %arg1[%c0, %c0_0, %c0_1] : memref<2x8x32xbf16, #tpu.memory_space<vmem>>, vector<2x8x32xbf16>
    %1 = vector.shape_cast %0 : vector<2x8x32xbf16> to vector<16x32xbf16>
    %c0_2 = arith.constant 0 : index
    %c0_3 = arith.constant 0 : index
    %2 = vector.load %arg4[%c0_2, %c0_3] : memref<1x128xf32, #tpu.memory_space<vmem>>, vector<1x96xf32>
    %c0_4 = arith.constant 0 : index
    %c96 = arith.constant 96 : index
    %3 = vector.load %arg4[%c0_4, %c96] : memref<1x128xf32, #tpu.memory_space<vmem>>, vector<1x32xf32>
    %c0_5 = arith.constant 0 : index
    %c0_6 = arith.constant 0 : index
    %4 = vector.load %arg3[%c0_5, %c0_6] : memref<32x96xbf16, #tpu.memory_space<vmem>>, vector<32x96xbf16>
    %cst = arith.constant dense<0.000000e+00> : vector<16x96xf32>
    %5 = tpu.matmul %1, %4, %cst {dimension_numbers = #tpu.dot_dimension_numbers<[1], [0], [0], [1], [0, 0, 1, 1], [], []>} : vector<16x32xbf16>, vector<32x96xbf16>, vector<16x96xf32> -> vector<16x96xf32>
    %6 = vector.broadcast %2 : vector<1x96xf32> to vector<16x96xf32>
    %7 = arith.addf %5, %6 : vector<16x96xf32>
    %c0_7 = arith.constant 0 : index
    %c0_8 = arith.constant 0 : index
    %8 = vector.load %arg2[%c0_7, %c0_8] : memref<2x8xf32, #tpu.memory_space<vmem>>, vector<2x8xf32>
    %9 = vector.extract_strided_slice %7 {offsets = [0, 0], sizes = [8, 32], strides = [1, 1]} : vector<16x96xf32> to vector<8x32xf32>
    %10 = vector.extract_strided_slice %7 {offsets = [0, 32], sizes = [8, 32], strides = [1, 1]} : vector<16x96xf32> to vector<8x32xf32>
    %11 = vector.extract_strided_slice %7 {offsets = [0, 64], sizes = [8, 32], strides = [1, 1]} : vector<16x96xf32> to vector<8x32xf32>
    %12 = tpu.transpose %10, [1, 0] : vector<8x32xf32> -> vector<32x8xf32>
    %13 = arith.truncf %12 : vector<32x8xf32> to vector<32x8xbf16>
    %14 = arith.truncf %9 : vector<8x32xf32> to vector<8x32xbf16>
    %15 = arith.truncf %11 : vector<8x32xf32> to vector<8x32xbf16>
    %16 = vector.extract_strided_slice %8 {offsets = [0, 0], sizes = [1, 8], strides = [1, 1]} : vector<2x8xf32> to vector<1x8xf32>
    %17 = vector.shape_cast %16 : vector<1x8xf32> to vector<1x8xf32>
    %18 = vector.broadcast %17 : vector<1x8xf32> to vector<8x8xf32>
    %19 = vector.extract_strided_slice %14 {offsets = [0, 0], sizes = [8, 8], strides = [1, 1]} : vector<8x32xbf16> to vector<8x8xbf16>
    %20 = vector.extract_strided_slice %13 {offsets = [0, 0], sizes = [8, 8], strides = [1, 1]} : vector<32x8xbf16> to vector<8x8xbf16>
    %cst_9 = arith.constant dense<0.000000e+00> : vector<8x8xf32>
    %21 = tpu.matmul %19, %20, %cst_9 {dimension_numbers = #tpu.dot_dimension_numbers<[1], [0], [0], [1], [0, 0, 1, 1], [], []>} : vector<8x8xbf16>, vector<8x8xbf16>, vector<8x8xf32> -> vector<8x8xf32>
    %22 = arith.mulf %21, %18 : vector<8x8xf32>
    %cst_10 = arith.constant dense<0xFF800000> : vector<8xf32>
    %23 = vector.multi_reduction <maximumf>, %22, %cst_10 [1] : vector<8x8xf32> to vector<8xf32>
    %24 = vector.shape_cast %23 : vector<8xf32> to vector<8x1xf32>
    %25 = vector.broadcast %24 : vector<8x1xf32> to vector<8x8xf32>
    %26 = arith.subf %22, %25 : vector<8x8xf32>
    %27 = math.exp %26 : vector<8x8xf32>
    %28 = arith.mulf %27, %18 : vector<8x8xf32>
    %cst_11 = arith.constant dense<0.000000e+00> : vector<8xf32>
    %29 = vector.multi_reduction <add>, %28, %cst_11 [1] : vector<8x8xf32> to vector<8xf32>
    %30 = vector.shape_cast %29 : vector<8xf32> to vector<8x1xf32>
    %cst_12 = arith.constant dense<0.000000e+00> : vector<8xf32>
    %31 = vector.multi_reduction <add>, %27, %cst_12 [1] : vector<8x8xf32> to vector<8xf32>
    %32 = vector.shape_cast %31 : vector<8xf32> to vector<8x1xf32>
    %cst_13 = arith.constant 9.99999982E-14 : f32
    %33 = vector.broadcast %cst_13 : f32 to vector<8x1xf32>
    %34 = arith.mulf %33, %32 : vector<8x1xf32>
    %35 = arith.addf %30, %34 : vector<8x1xf32>
    %36 = tpu.reciprocal %35 {approx = true} : vector<8x1xf32> -> vector<8x1xf32>
    %37 = vector.broadcast %36 : vector<8x1xf32> to vector<8x8xf32>
    %38 = arith.mulf %28, %37 : vector<8x8xf32>
    %39 = arith.truncf %38 : vector<8x8xf32> to vector<8x8xbf16>
    %40 = vector.extract_strided_slice %15 {offsets = [0, 0], sizes = [8, 8], strides = [1, 1]} : vector<8x32xbf16> to vector<8x8xbf16>
    %cst_14 = arith.constant dense<0.000000e+00> : vector<8x8xf32>
    %41 = tpu.matmul %39, %40, %cst_14 {dimension_numbers = #tpu.dot_dimension_numbers<[1], [0], [0], [1], [0, 0, 1, 1], [], []>} : vector<8x8xbf16>, vector<8x8xbf16>, vector<8x8xf32> -> vector<8x8xf32>
    %42 = vector.extract_strided_slice %14 {offsets = [0, 8], sizes = [8, 8], strides = [1, 1]} : vector<8x32xbf16> to vector<8x8xbf16>
    %43 = vector.extract_strided_slice %13 {offsets = [8, 0], sizes = [8, 8], strides = [1, 1]} : vector<32x8xbf16> to vector<8x8xbf16>
    %cst_15 = arith.constant dense<0.000000e+00> : vector<8x8xf32>
    %44 = tpu.matmul %42, %43, %cst_15 {dimension_numbers = #tpu.dot_dimension_numbers<[1], [0], [0], [1], [0, 0, 1, 1], [], []>} : vector<8x8xbf16>, vector<8x8xbf16>, vector<8x8xf32> -> vector<8x8xf32>
    %45 = arith.mulf %44, %18 : vector<8x8xf32>
    %cst_16 = arith.constant dense<0xFF800000> : vector<8xf32>
    %46 = vector.multi_reduction <maximumf>, %45, %cst_16 [1] : vector<8x8xf32> to vector<8xf32>
    %47 = vector.shape_cast %46 : vector<8xf32> to vector<8x1xf32>
    %48 = vector.broadcast %47 : vector<8x1xf32> to vector<8x8xf32>
    %49 = arith.subf %45, %48 : vector<8x8xf32>
    %50 = math.exp %49 : vector<8x8xf32>
    %51 = arith.mulf %50, %18 : vector<8x8xf32>
    %cst_17 = arith.constant dense<0.000000e+00> : vector<8xf32>
    %52 = vector.multi_reduction <add>, %51, %cst_17 [1] : vector<8x8xf32> to vector<8xf32>
    %53 = vector.shape_cast %52 : vector<8xf32> to vector<8x1xf32>
    %cst_18 = arith.constant dense<0.000000e+00> : vector<8xf32>
    %54 = vector.multi_reduction <add>, %50, %cst_18 [1] : vector<8x8xf32> to vector<8xf32>
    %55 = vector.shape_cast %54 : vector<8xf32> to vector<8x1xf32>
    %cst_19 = arith.constant 9.99999982E-14 : f32
    %56 = vector.broadcast %cst_19 : f32 to vector<8x1xf32>
    %57 = arith.mulf %56, %55 : vector<8x1xf32>
    %58 = arith.addf %53, %57 : vector<8x1xf32>
    %59 = tpu.reciprocal %58 {approx = true} : vector<8x1xf32> -> vector<8x1xf32>
    %60 = vector.broadcast %59 : vector<8x1xf32> to vector<8x8xf32>
    %61 = arith.mulf %51, %60 : vector<8x8xf32>
    %62 = arith.truncf %61 : vector<8x8xf32> to vector<8x8xbf16>
    %63 = vector.extract_strided_slice %15 {offsets = [0, 8], sizes = [8, 8], strides = [1, 1]} : vector<8x32xbf16> to vector<8x8xbf16>
    %cst_20 = arith.constant dense<0.000000e+00> : vector<8x8xf32>
    %64 = tpu.matmul %62, %63, %cst_20 {dimension_numbers = #tpu.dot_dimension_numbers<[1], [0], [0], [1], [0, 0, 1, 1], [], []>} : vector<8x8xbf16>, vector<8x8xbf16>, vector<8x8xf32> -> vector<8x8xf32>
    %65 = vector.extract_strided_slice %14 {offsets = [0, 16], sizes = [8, 8], strides = [1, 1]} : vector<8x32xbf16> to vector<8x8xbf16>
    %66 = vector.extract_strided_slice %13 {offsets = [16, 0], sizes = [8, 8], strides = [1, 1]} : vector<32x8xbf16> to vector<8x8xbf16>
    %cst_21 = arith.constant dense<0.000000e+00> : vector<8x8xf32>
    %67 = tpu.matmul %65, %66, %cst_21 {dimension_numbers = #tpu.dot_dimension_numbers<[1], [0], [0], [1], [0, 0, 1, 1], [], []>} : vector<8x8xbf16>, vector<8x8xbf16>, vector<8x8xf32> -> vector<8x8xf32>
    %68 = arith.mulf %67, %18 : vector<8x8xf32>
    %cst_22 = arith.constant dense<0xFF800000> : vector<8xf32>
    %69 = vector.multi_reduction <maximumf>, %68, %cst_22 [1] : vector<8x8xf32> to vector<8xf32>
    %70 = vector.shape_cast %69 : vector<8xf32> to vector<8x1xf32>
    %71 = vector.broadcast %70 : vector<8x1xf32> to vector<8x8xf32>
    %72 = arith.subf %68, %71 : vector<8x8xf32>
    %73 = math.exp %72 : vector<8x8xf32>
    %74 = arith.mulf %73, %18 : vector<8x8xf32>
    %cst_23 = arith.constant dense<0.000000e+00> : vector<8xf32>
    %75 = vector.multi_reduction <add>, %74, %cst_23 [1] : vector<8x8xf32> to vector<8xf32>
    %76 = vector.shape_cast %75 : vector<8xf32> to vector<8x1xf32>
    %cst_24 = arith.constant dense<0.000000e+00> : vector<8xf32>
    %77 = vector.multi_reduction <add>, %73, %cst_24 [1] : vector<8x8xf32> to vector<8xf32>
    %78 = vector.shape_cast %77 : vector<8xf32> to vector<8x1xf32>
    %cst_25 = arith.constant 9.99999982E-14 : f32
    %79 = vector.broadcast %cst_25 : f32 to vector<8x1xf32>
    %80 = arith.mulf %79, %78 : vector<8x1xf32>
    %81 = arith.addf %76, %80 : vector<8x1xf32>
    %82 = tpu.reciprocal %81 {approx = true} : vector<8x1xf32> -> vector<8x1xf32>
    %83 = vector.broadcast %82 : vector<8x1xf32> to vector<8x8xf32>
    %84 = arith.mulf %74, %83 : vector<8x8xf32>
    %85 = arith.truncf %84 : vector<8x8xf32> to vector<8x8xbf16>
    %86 = vector.extract_strided_slice %15 {offsets = [0, 16], sizes = [8, 8], strides = [1, 1]} : vector<8x32xbf16> to vector<8x8xbf16>
    %cst_26 = arith.constant dense<0.000000e+00> : vector<8x8xf32>
    %87 = tpu.matmul %85, %86, %cst_26 {dimension_numbers = #tpu.dot_dimension_numbers<[1], [0], [0], [1], [0, 0, 1, 1], [], []>} : vector<8x8xbf16>, vector<8x8xbf16>, vector<8x8xf32> -> vector<8x8xf32>
    %88 = vector.extract_strided_slice %14 {offsets = [0, 24], sizes = [8, 8], strides = [1, 1]} : vector<8x32xbf16> to vector<8x8xbf16>
    %89 = vector.extract_strided_slice %13 {offsets = [24, 0], sizes = [8, 8], strides = [1, 1]} : vector<32x8xbf16> to vector<8x8xbf16>
    %cst_27 = arith.constant dense<0.000000e+00> : vector<8x8xf32>
    %90 = tpu.matmul %88, %89, %cst_27 {dimension_numbers = #tpu.dot_dimension_numbers<[1], [0], [0], [1], [0, 0, 1, 1], [], []>} : vector<8x8xbf16>, vector<8x8xbf16>, vector<8x8xf32> -> vector<8x8xf32>
    %91 = arith.mulf %90, %18 : vector<8x8xf32>
    %cst_28 = arith.constant dense<0xFF800000> : vector<8xf32>
    %92 = vector.multi_reduction <maximumf>, %91, %cst_28 [1] : vector<8x8xf32> to vector<8xf32>
    %93 = vector.shape_cast %92 : vector<8xf32> to vector<8x1xf32>
    %94 = vector.broadcast %93 : vector<8x1xf32> to vector<8x8xf32>
    %95 = arith.subf %91, %94 : vector<8x8xf32>
    %96 = math.exp %95 : vector<8x8xf32>
    %97 = arith.mulf %96, %18 : vector<8x8xf32>
    %cst_29 = arith.constant dense<0.000000e+00> : vector<8xf32>
    %98 = vector.multi_reduction <add>, %97, %cst_29 [1] : vector<8x8xf32> to vector<8xf32>
    %99 = vector.shape_cast %98 : vector<8xf32> to vector<8x1xf32>
    %cst_30 = arith.constant dense<0.000000e+00> : vector<8xf32>
    %100 = vector.multi_reduction <add>, %96, %cst_30 [1] : vector<8x8xf32> to vector<8xf32>
    %101 = vector.shape_cast %100 : vector<8xf32> to vector<8x1xf32>
    %cst_31 = arith.constant 9.99999982E-14 : f32
    %102 = vector.broadcast %cst_31 : f32 to vector<8x1xf32>
    %103 = arith.mulf %102, %101 : vector<8x1xf32>
    %104 = arith.addf %99, %103 : vector<8x1xf32>
    %105 = tpu.reciprocal %104 {approx = true} : vector<8x1xf32> -> vector<8x1xf32>
    %106 = vector.broadcast %105 : vector<8x1xf32> to vector<8x8xf32>
    %107 = arith.mulf %97, %106 : vector<8x8xf32>
    %108 = arith.truncf %107 : vector<8x8xf32> to vector<8x8xbf16>
    %109 = vector.extract_strided_slice %15 {offsets = [0, 24], sizes = [8, 8], strides = [1, 1]} : vector<8x32xbf16> to vector<8x8xbf16>
    %cst_32 = arith.constant dense<0.000000e+00> : vector<8x8xf32>
    %110 = tpu.matmul %108, %109, %cst_32 {dimension_numbers = #tpu.dot_dimension_numbers<[1], [0], [0], [1], [0, 0, 1, 1], [], []>} : vector<8x8xbf16>, vector<8x8xbf16>, vector<8x8xf32> -> vector<8x8xf32>
    %111 = tpu.concatenate %41, %64, %87, %110 in 1 : vector<8x8xf32>, vector<8x8xf32>, vector<8x8xf32>, vector<8x8xf32> -> vector<8x32xf32>
    %112 = arith.truncf %111 : vector<8x32xf32> to vector<8x32xbf16>
    %c0_33 = arith.constant 0 : index
    %c0_34 = arith.constant 0 : index
    %113 = vector.load %arg5[%c0_33, %c0_34] : memref<32x32xbf16, #tpu.memory_space<vmem>>, vector<32x32xbf16>
    %cst_35 = arith.constant dense<0.000000e+00> : vector<8x32xf32>
    %114 = tpu.matmul %112, %113, %cst_35 {dimension_numbers = #tpu.dot_dimension_numbers<[1], [0], [0], [1], [0, 0, 1, 1], [], []>} : vector<8x32xbf16>, vector<32x32xbf16>, vector<8x32xf32> -> vector<8x32xf32>
    %115 = vector.broadcast %3 : vector<1x32xf32> to vector<8x32xf32>
    %116 = arith.addf %114, %115 : vector<8x32xf32>
    %c0_36 = arith.constant 0 : index
    %c0_37 = arith.constant 0 : index
    %c0_38 = arith.constant 0 : index
    %117 = vector.load %arg6[%c0_36, %c0_37, %c0_38] : memref<2x8x32xf32, #tpu.memory_space<vmem>>, vector<1x8x32xf32>
    %118 = vector.shape_cast %117 : vector<1x8x32xf32> to vector<8x32xf32>
    %119 = vector.shape_cast %116 : vector<8x32xf32> to vector<1x8x32xf32>
    tpu.vector_store %arg6[%c0_36, %c0_37, %c0_38], %119 {strides = array<i32>} : memref<2x8x32xf32, #tpu.memory_space<vmem>>, vector<1x8x32xf32>,
    %120 = vector.extract_strided_slice %7 {offsets = [8, 0], sizes = [8, 32], strides = [1, 1]} : vector<16x96xf32> to vector<8x32xf32>
    %121 = vector.extract_strided_slice %7 {offsets = [8, 32], sizes = [8, 32], strides = [1, 1]} : vector<16x96xf32> to vector<8x32xf32>
    %122 = vector.extract_strided_slice %7 {offsets = [8, 64], sizes = [8, 32], strides = [1, 1]} : vector<16x96xf32> to vector<8x32xf32>
    %123 = tpu.transpose %121, [1, 0] : vector<8x32xf32> -> vector<32x8xf32>
    %124 = arith.truncf %123 : vector<32x8xf32> to vector<32x8xbf16>
    %125 = arith.truncf %120 : vector<8x32xf32> to vector<8x32xbf16>
    %126 = arith.truncf %122 : vector<8x32xf32> to vector<8x32xbf16>
    %127 = vector.extract_strided_slice %8 {offsets = [1, 0], sizes = [1, 8], strides = [1, 1]} : vector<2x8xf32> to vector<1x8xf32>
    %128 = vector.shape_cast %127 : vector<1x8xf32> to vector<1x8xf32>
    %129 = vector.broadcast %128 : vector<1x8xf32> to vector<8x8xf32>
    %130 = vector.extract_strided_slice %125 {offsets = [0, 0], sizes = [8, 8], strides = [1, 1]} : vector<8x32xbf16> to vector<8x8xbf16>
    %131 = vector.extract_strided_slice %124 {offsets = [0, 0], sizes = [8, 8], strides = [1, 1]} : vector<32x8xbf16> to vector<8x8xbf16>
    %cst_39 = arith.constant dense<0.000000e+00> : vector<8x8xf32>
    %132 = tpu.matmul %130, %131, %cst_39 {dimension_numbers = #tpu.dot_dimension_numbers<[1], [0], [0], [1], [0, 0, 1, 1], [], []>} : vector<8x8xbf16>, vector<8x8xbf16>, vector<8x8xf32> -> vector<8x8xf32>
    %133 = arith.mulf %132, %129 : vector<8x8xf32>
    %cst_40 = arith.constant dense<0xFF800000> : vector<8xf32>
    %134 = vector.multi_reduction <maximumf>, %133, %cst_40 [1] : vector<8x8xf32> to vector<8xf32>
    %135 = vector.shape_cast %134 : vector<8xf32> to vector<8x1xf32>
    %136 = vector.broadcast %135 : vector<8x1xf32> to vector<8x8xf32>
    %137 = arith.subf %133, %136 : vector<8x8xf32>
    %138 = math.exp %137 : vector<8x8xf32>
    %139 = arith.mulf %138, %129 : vector<8x8xf32>
    %cst_41 = arith.constant dense<0.000000e+00> : vector<8xf32>
    %140 = vector.multi_reduction <add>, %139, %cst_41 [1] : vector<8x8xf32> to vector<8xf32>
    %141 = vector.shape_cast %140 : vector<8xf32> to vector<8x1xf32>
    %cst_42 = arith.constant dense<0.000000e+00> : vector<8xf32>
    %142 = vector.multi_reduction <add>, %138, %cst_42 [1] : vector<8x8xf32> to vector<8xf32>
    %143 = vector.shape_cast %142 : vector<8xf32> to vector<8x1xf32>
    %cst_43 = arith.constant 9.99999982E-14 : f32
    %144 = vector.broadcast %cst_43 : f32 to vector<8x1xf32>
    %145 = arith.mulf %144, %143 : vector<8x1xf32>
    %146 = arith.addf %141, %145 : vector<8x1xf32>
    %147 = tpu.reciprocal %146 {approx = true} : vector<8x1xf32> -> vector<8x1xf32>
    %148 = vector.broadcast %147 : vector<8x1xf32> to vector<8x8xf32>
    %149 = arith.mulf %139, %148 : vector<8x8xf32>
    %150 = arith.truncf %149 : vector<8x8xf32> to vector<8x8xbf16>
    %151 = vector.extract_strided_slice %126 {offsets = [0, 0], sizes = [8, 8], strides = [1, 1]} : vector<8x32xbf16> to vector<8x8xbf16>
    %cst_44 = arith.constant dense<0.000000e+00> : vector<8x8xf32>
    %152 = tpu.matmul %150, %151, %cst_44 {dimension_numbers = #tpu.dot_dimension_numbers<[1], [0], [0], [1], [0, 0, 1, 1], [], []>} : vector<8x8xbf16>, vector<8x8xbf16>, vector<8x8xf32> -> vector<8x8xf32>
    %153 = vector.extract_strided_slice %125 {offsets = [0, 8], sizes = [8, 8], strides = [1, 1]} : vector<8x32xbf16> to vector<8x8xbf16>
    %154 = vector.extract_strided_slice %124 {offsets = [8, 0], sizes = [8, 8], strides = [1, 1]} : vector<32x8xbf16> to vector<8x8xbf16>
    %cst_45 = arith.constant dense<0.000000e+00> : vector<8x8xf32>
    %155 = tpu.matmul %153, %154, %cst_45 {dimension_numbers = #tpu.dot_dimension_numbers<[1], [0], [0], [1], [0, 0, 1, 1], [], []>} : vector<8x8xbf16>, vector<8x8xbf16>, vector<8x8xf32> -> vector<8x8xf32>
    %156 = arith.mulf %155, %129 : vector<8x8xf32>
    %cst_46 = arith.constant dense<0xFF800000> : vector<8xf32>
    %157 = vector.multi_reduction <maximumf>, %156, %cst_46 [1] : vector<8x8xf32> to vector<8xf32>
    %158 = vector.shape_cast %157 : vector<8xf32> to vector<8x1xf32>
    %159 = vector.broadcast %158 : vector<8x1xf32> to vector<8x8xf32>
    %160 = arith.subf %156, %159 : vector<8x8xf32>
    %161 = math.exp %160 : vector<8x8xf32>
    %162 = arith.mulf %161, %129 : vector<8x8xf32>
    %cst_47 = arith.constant dense<0.000000e+00> : vector<8xf32>
    %163 = vector.multi_reduction <add>, %162, %cst_47 [1] : vector<8x8xf32> to vector<8xf32>
    %164 = vector.shape_cast %163 : vector<8xf32> to vector<8x1xf32>
    %cst_48 = arith.constant dense<0.000000e+00> : vector<8xf32>
    %165 = vector.multi_reduction <add>, %161, %cst_48 [1] : vector<8x8xf32> to vector<8xf32>
    %166 = vector.shape_cast %165 : vector<8xf32> to vector<8x1xf32>
    %cst_49 = arith.constant 9.99999982E-14 : f32
    %167 = vector.broadcast %cst_49 : f32 to vector<8x1xf32>
    %168 = arith.mulf %167, %166 : vector<8x1xf32>
    %169 = arith.addf %164, %168 : vector<8x1xf32>
    %170 = tpu.reciprocal %169 {approx = true} : vector<8x1xf32> -> vector<8x1xf32>
    %171 = vector.broadcast %170 : vector<8x1xf32> to vector<8x8xf32>
    %172 = arith.mulf %162, %171 : vector<8x8xf32>
    %173 = arith.truncf %172 : vector<8x8xf32> to vector<8x8xbf16>
    %174 = vector.extract_strided_slice %126 {offsets = [0, 8], sizes = [8, 8], strides = [1, 1]} : vector<8x32xbf16> to vector<8x8xbf16>
    %cst_50 = arith.constant dense<0.000000e+00> : vector<8x8xf32>
    %175 = tpu.matmul %173, %174, %cst_50 {dimension_numbers = #tpu.dot_dimension_numbers<[1], [0], [0], [1], [0, 0, 1, 1], [], []>} : vector<8x8xbf16>, vector<8x8xbf16>, vector<8x8xf32> -> vector<8x8xf32>
    %176 = vector.extract_strided_slice %125 {offsets = [0, 16], sizes = [8, 8], strides = [1, 1]} : vector<8x32xbf16> to vector<8x8xbf16>
    %177 = vector.extract_strided_slice %124 {offsets = [16, 0], sizes = [8, 8], strides = [1, 1]} : vector<32x8xbf16> to vector<8x8xbf16>
    %cst_51 = arith.constant dense<0.000000e+00> : vector<8x8xf32>
    %178 = tpu.matmul %176, %177, %cst_51 {dimension_numbers = #tpu.dot_dimension_numbers<[1], [0], [0], [1], [0, 0, 1, 1], [], []>} : vector<8x8xbf16>, vector<8x8xbf16>, vector<8x8xf32> -> vector<8x8xf32>
    %179 = arith.mulf %178, %129 : vector<8x8xf32>
    %cst_52 = arith.constant dense<0xFF800000> : vector<8xf32>
    %180 = vector.multi_reduction <maximumf>, %179, %cst_52 [1] : vector<8x8xf32> to vector<8xf32>
    %181 = vector.shape_cast %180 : vector<8xf32> to vector<8x1xf32>
    %182 = vector.broadcast %181 : vector<8x1xf32> to vector<8x8xf32>
    %183 = arith.subf %179, %182 : vector<8x8xf32>
    %184 = math.exp %183 : vector<8x8xf32>
    %185 = arith.mulf %184, %129 : vector<8x8xf32>
    %cst_53 = arith.constant dense<0.000000e+00> : vector<8xf32>
    %186 = vector.multi_reduction <add>, %185, %cst_53 [1] : vector<8x8xf32> to vector<8xf32>
    %187 = vector.shape_cast %186 : vector<8xf32> to vector<8x1xf32>
    %cst_54 = arith.constant dense<0.000000e+00> : vector<8xf32>
    %188 = vector.multi_reduction <add>, %184, %cst_54 [1] : vector<8x8xf32> to vector<8xf32>
    %189 = vector.shape_cast %188 : vector<8xf32> to vector<8x1xf32>
    %cst_55 = arith.constant 9.99999982E-14 : f32
    %190 = vector.broadcast %cst_55 : f32 to vector<8x1xf32>
    %191 = arith.mulf %190, %189 : vector<8x1xf32>
    %192 = arith.addf %187, %191 : vector<8x1xf32>
    %193 = tpu.reciprocal %192 {approx = true} : vector<8x1xf32> -> vector<8x1xf32>
    %194 = vector.broadcast %193 : vector<8x1xf32> to vector<8x8xf32>
    %195 = arith.mulf %185, %194 : vector<8x8xf32>
    %196 = arith.truncf %195 : vector<8x8xf32> to vector<8x8xbf16>
    %197 = vector.extract_strided_slice %126 {offsets = [0, 16], sizes = [8, 8], strides = [1, 1]} : vector<8x32xbf16> to vector<8x8xbf16>
    %cst_56 = arith.constant dense<0.000000e+00> : vector<8x8xf32>
    %198 = tpu.matmul %196, %197, %cst_56 {dimension_numbers = #tpu.dot_dimension_numbers<[1], [0], [0], [1], [0, 0, 1, 1], [], []>} : vector<8x8xbf16>, vector<8x8xbf16>, vector<8x8xf32> -> vector<8x8xf32>
    %199 = vector.extract_strided_slice %125 {offsets = [0, 24], sizes = [8, 8], strides = [1, 1]} : vector<8x32xbf16> to vector<8x8xbf16>
    %200 = vector.extract_strided_slice %124 {offsets = [24, 0], sizes = [8, 8], strides = [1, 1]} : vector<32x8xbf16> to vector<8x8xbf16>
    %cst_57 = arith.constant dense<0.000000e+00> : vector<8x8xf32>
    %201 = tpu.matmul %199, %200, %cst_57 {dimension_numbers = #tpu.dot_dimension_numbers<[1], [0], [0], [1], [0, 0, 1, 1], [], []>} : vector<8x8xbf16>, vector<8x8xbf16>, vector<8x8xf32> -> vector<8x8xf32>
    %202 = arith.mulf %201, %129 : vector<8x8xf32>
    %cst_58 = arith.constant dense<0xFF800000> : vector<8xf32>
    %203 = vector.multi_reduction <maximumf>, %202, %cst_58 [1] : vector<8x8xf32> to vector<8xf32>
    %204 = vector.shape_cast %203 : vector<8xf32> to vector<8x1xf32>
    %205 = vector.broadcast %204 : vector<8x1xf32> to vector<8x8xf32>
    %206 = arith.subf %202, %205 : vector<8x8xf32>
    %207 = math.exp %206 : vector<8x8xf32>
    %208 = arith.mulf %207, %129 : vector<8x8xf32>
    %cst_59 = arith.constant dense<0.000000e+00> : vector<8xf32>
    %209 = vector.multi_reduction <add>, %208, %cst_59 [1] : vector<8x8xf32> to vector<8xf32>
    %210 = vector.shape_cast %209 : vector<8xf32> to vector<8x1xf32>
    %cst_60 = arith.constant dense<0.000000e+00> : vector<8xf32>
    %211 = vector.multi_reduction <add>, %207, %cst_60 [1] : vector<8x8xf32> to vector<8xf32>
    %212 = vector.shape_cast %211 : vector<8xf32> to vector<8x1xf32>
    %cst_61 = arith.constant 9.99999982E-14 : f32
    %213 = vector.broadcast %cst_61 : f32 to vector<8x1xf32>
    %214 = arith.mulf %213, %212 : vector<8x1xf32>
    %215 = arith.addf %210, %214 : vector<8x1xf32>
    %216 = tpu.reciprocal %215 {approx = true} : vector<8x1xf32> -> vector<8x1xf32>
    %217 = vector.broadcast %216 : vector<8x1xf32> to vector<8x8xf32>
    %218 = arith.mulf %208, %217 : vector<8x8xf32>
    %219 = arith.truncf %218 : vector<8x8xf32> to vector<8x8xbf16>
    %220 = vector.extract_strided_slice %126 {offsets = [0, 24], sizes = [8, 8], strides = [1, 1]} : vector<8x32xbf16> to vector<8x8xbf16>
    %cst_62 = arith.constant dense<0.000000e+00> : vector<8x8xf32>
    %221 = tpu.matmul %219, %220, %cst_62 {dimension_numbers = #tpu.dot_dimension_numbers<[1], [0], [0], [1], [0, 0, 1, 1], [], []>} : vector<8x8xbf16>, vector<8x8xbf16>, vector<8x8xf32> -> vector<8x8xf32>
    %222 = tpu.concatenate %152, %175, %198, %221 in 1 : vector<8x8xf32>, vector<8x8xf32>, vector<8x8xf32>, vector<8x8xf32> -> vector<8x32xf32>
    %223 = arith.truncf %222 : vector<8x32xf32> to vector<8x32xbf16>
    %c0_63 = arith.constant 0 : index
    %c0_64 = arith.constant 0 : index
    %224 = vector.load %arg5[%c0_63, %c0_64] : memref<32x32xbf16, #tpu.memory_space<vmem>>, vector<32x32xbf16>
    %cst_65 = arith.constant dense<0.000000e+00> : vector<8x32xf32>
    %225 = tpu.matmul %223, %224, %cst_65 {dimension_numbers = #tpu.dot_dimension_numbers<[1], [0], [0], [1], [0, 0, 1, 1], [], []>} : vector<8x32xbf16>, vector<32x32xbf16>, vector<8x32xf32> -> vector<8x32xf32>
    %226 = vector.broadcast %3 : vector<1x32xf32> to vector<8x32xf32>
    %227 = arith.addf %225, %226 : vector<8x32xf32>
    %c1 = arith.constant 1 : index
    %c0_66 = arith.constant 0 : index
    %c0_67 = arith.constant 0 : index
    %228 = vector.load %arg6[%c1, %c0_66, %c0_67] : memref<2x8x32xf32, #tpu.memory_space<vmem>>, vector<1x8x32xf32>
    %229 = vector.shape_cast %228 : vector<1x8x32xf32> to vector<8x32xf32>
    %230 = vector.shape_cast %227 : vector<8x32xf32> to vector<1x8x32xf32>
    tpu.vector_store %arg6[%c1, %c0_66, %c0_67], %230 {strides = array<i32>} : memref<2x8x32xf32, #tpu.memory_space<vmem>>, vector<1x8x32xf32>,
    return
  }
  func.func @transform_0(%arg0: i32) -> (i32, i32, i32) {
    %c0_i32 = arith.constant 0 : i32
    %c0_i32_0 = arith.constant 0 : i32
    %c0_i32_1 = arith.constant 0 : i32
    %c0_i32_2 = arith.constant 0 : i32
    return %c0_i32, %c0_i32_0, %c0_i32_1 : i32, i32, i32
  }
  func.func @transform_1(%arg0: i32) -> (i32, i32) {
    %c0_i32 = arith.constant 0 : i32
    %c0_i32_0 = arith.constant 0 : i32
    %c0_i32_1 = arith.constant 0 : i32
    return %c0_i32, %c0_i32_0 : i32, i32
  }
  func.func @transform_2(%arg0: i32) -> (i32, i32) {
    %c0_i32 = arith.constant 0 : i32
    %c0_i32_0 = arith.constant 0 : i32
    %c0_i32_1 = arith.constant 0 : i32
    return %c0_i32, %c0_i32_0 : i32, i32
  }
  func.func @transform_3(%arg0: i32) -> (i32, i32) {
    %c0_i32 = arith.constant 0 : i32
    %c0_i32_0 = arith.constant 0 : i32
    %c0_i32_1 = arith.constant 0 : i32
    return %c0_i32, %c0_i32_0 : i32, i32
  }
  func.func @transform_4(%arg0: i32) -> (i32, i32) {
    %c0_i32 = arith.constant 0 : i32
    %c0_i32_0 = arith.constant 0 : i32
    %c0_i32_1 = arith.constant 0 : i32
    return %c0_i32, %c0_i32_0 : i32, i32
  }
  func.func @transform_5(%arg0: i32) -> (i32, i32, i32) {
    %c0_i32 = arith.constant 0 : i32
    %c0_i32_0 = arith.constant 0 : i32
    %c0_i32_1 = arith.constant 0 : i32
    %c0_i32_2 = arith.constant 0 : i32
    return %c0_i32, %c0_i32_0, %c0_i32_1 : i32, i32, i32
  }
}

</mosaic_0001>

<llo_original>
// kernel: tpu_custom_call.1
$region0: #{tpu_custom_call.1}
  #allocation0 [shape = 'u32[]', space=smem, size = 0x4, offset = 0x4, fixed_abs, tag = 'smem constant byte address 0x4 - core index']
  #allocation1 [shape = 'u32[72,128]{1,0:T(1,128)}', space=vmem, size = 0x9000, scoped, tag = 'internal scratch']
  %s0 = inlined_call_operand.hbm [shape: bf16[2,8,32], index: 0, kind: input, shape index: {}]
  %s1 = inlined_call_operand.hbm [shape: f32[2,8], index: 1, kind: input, shape index: {}]
  %s2 = inlined_call_operand.hbm [shape: bf16[32,96], index: 2, kind: input, shape index: {}]
  %s3 = inlined_call_operand.vmem [shape: f32[1,128], index: 3, kind: input, shape index: {}]
  %s4 = inlined_call_operand.hbm [shape: bf16[32,32], index: 4, kind: input, shape index: {}]
  %s5 = inlined_call_operand.hbm [shape: f32[2,8,32], index: 5, kind: output, shape index: {}]
  %s6 = sld [smem:[#allocation0]]
  $region46: #{tpu_custom_call.1} parent=0
    _
  %s8 = ssub.s32 1, %s6
  %s9 = scalar_select 0, %s8, %s6
  $region1: #{tpu_custom_call.1} parent=0
    #allocation2 [shape = 'u8[4096]{0}', space=vmem, size = 0x1000, scoped, tag = 'input window, operand 0, single buffered']
    #allocation3 [shape = 's32[1]{0}', space=sflag, size = 0x4, scoped, tag = 'scoped memory for tpu_custom_call.1']
    #allocation4 [shape = 's32[1]{0}', space=sflag, size = 0x4, scoped, tag = 'scoped memory for tpu_custom_call.1']
    #allocation5 [shape = 'u8[1024]{0}', space=vmem, size = 0x400, scoped, tag = 'input window, operand 1, single buffered']
    #allocation6 [shape = 's32[1]{0}', space=sflag, size = 0x4, scoped, tag = 'scoped memory for tpu_custom_call.1']
    #allocation7 [shape = 'u8[8192]{0}', space=vmem, size = 0x2000, scoped, tag = 'input window, operand 2, single buffered']
    #allocation8 [shape = 'u8[8192]{0}', space=vmem, size = 0x2000, scoped, tag = 'input window, operand 4, single buffered']
    #allocation9 [shape = 's32[1]{0}', space=sflag, size = 0x4, scoped, tag = 'scoped memory for tpu_custom_call.1']
    #allocation10 [shape = 'u8[8192]{0}', space=vmem, size = 0x2000, scoped, tag = 'output window, operand 0, single buffered']
    %10 = vsyncpa [#allocation3], 0
    %11 = vsyncpa [#allocation6], 0
    %12 = vsyncpa [#allocation9], 0
    %13 = vsyncpa [#allocation4], 0
    // Predicated region
    $region2: #{tpu_custom_call.1} parent=1 // pred_check
      _
    $region3: #{tpu_custom_call.1} parent=1 // pred_check_branch
      %15 = sbr.rel (0) target = $region5
    $region4: #{tpu_custom_call.1} parent=1 // pred_region
      %17 = vsyncadd [#allocation3], 0
      %s18 = sshll.u32 %s0, 4
      %s19 = int_to_ptr.hbm [resolvable:$true] %s18
      %s20 = sshll.u32 [#allocation2], 4
      %s21 = int_to_ptr.vmem [resolvable:$true] %s20
      %26 = dma.hbm_to_vmem [thread:$0]  %s19, 128, %s21, [#allocation3], 64, 64, 4
    $region5: #{tpu_custom_call.1} parent=1 // pred_fallthru
      _
    // Predicated region
    $region6: #{tpu_custom_call.1} parent=1 // pred_check
      _
    $region7: #{tpu_custom_call.1} parent=1 // pred_check_branch
      %28 = sbr.rel (0) target = $region9
    $region8: #{tpu_custom_call.1} parent=1 // pred_region
      %30 = vsyncadd [#allocation6], 0
      %s32 = sshll.u32 %s1, 4
      %s33 = int_to_ptr.hbm [resolvable:$true] %s32
      %s34 = sshll.u32 [#allocation5], 4
      %s35 = int_to_ptr.vmem [resolvable:$true] %s34
      %37 = dma.hbm_to_vmem [thread:$0]  %s33, 32, %s35, [#allocation6]
    $region9: #{tpu_custom_call.1} parent=1 // pred_fallthru
      _
    // Predicated region
    $region10: #{tpu_custom_call.1} parent=1 // pred_check
      _
    $region11: #{tpu_custom_call.1} parent=1 // pred_check_branch
      %39 = sbr.rel (0) target = $region13
    $region12: #{tpu_custom_call.1} parent=1 // pred_region
      %41 = vsyncadd [#allocation6], 0
      %s42 = sshll.u32 %s2, 4
      %s43 = int_to_ptr.hbm [resolvable:$true] %s42
      %s44 = sshll.u32 [#allocation7], 4
      %s45 = int_to_ptr.vmem [resolvable:$true] %s44
      %50 = dma.hbm_to_vmem [thread:$0]  %s43, 256, %s45, [#allocation6], 64, 64, 4
    $region13: #{tpu_custom_call.1} parent=1 // pred_fallthru
      _
    // Predicated region
    $region14: #{tpu_custom_call.1} parent=1 // pred_check
      _
    $region15: #{tpu_custom_call.1} parent=1 // pred_check_branch
      %52 = sbr.rel (0) target = $region17
    $region16: #{tpu_custom_call.1} parent=1 // pred_region
      _
    $region17: #{tpu_custom_call.1} parent=1 // pred_fallthru
      _
    // Predicated region
    $region18: #{tpu_custom_call.1} parent=1 // pred_check
      _
    $region19: #{tpu_custom_call.1} parent=1 // pred_check_branch
      %54 = sbr.rel (0) target = $region21
    $region20: #{tpu_custom_call.1} parent=1 // pred_region
      %56 = vsyncadd [#allocation9], 0
      %s57 = sshll.u32 %s4, 4
      %s58 = int_to_ptr.hbm [resolvable:$true] %s57
      %s59 = sshll.u32 [#allocation8], 4
      %s60 = int_to_ptr.vmem [resolvable:$true] %s59
      %65 = dma.hbm_to_vmem [thread:$0]  %s58, 256, %s60, [#allocation9], 64, 64, 4
    $region21: #{tpu_custom_call.1} parent=1 // pred_fallthru
      _
    // Predicated region
    $region22: #{tpu_custom_call.1} parent=1 // pred_check
      _
    $region23: #{tpu_custom_call.1} parent=1 // pred_check_branch
      %67 = sbr.rel (0) target = $region25
    $region24: #{tpu_custom_call.1} parent=1 // pred_region
      %69 = dma.done [#allocation3], 128
    $region25: #{tpu_custom_call.1} parent=1 // pred_fallthru
      _
    // Predicated region
    $region26: #{tpu_custom_call.1} parent=1 // pred_check
      _
    $region27: #{tpu_custom_call.1} parent=1 // pred_check_branch
      %71 = sbr.rel (0) target = $region29
    $region28: #{tpu_custom_call.1} parent=1 // pred_region
      %73 = dma.done [#allocation6], 32
    $region29: #{tpu_custom_call.1} parent=1 // pred_fallthru
      _
    // Predicated region
    $region30: #{tpu_custom_call.1} parent=1 // pred_check
      _
    $region31: #{tpu_custom_call.1} parent=1 // pred_check_branch
      %75 = sbr.rel (0) target = $region33
    $region32: #{tpu_custom_call.1} parent=1 // pred_region
      %77 = dma.done [#allocation6], 256
    $region33: #{tpu_custom_call.1} parent=1 // pred_fallthru
      _
    // Predicated region
    $region34: #{tpu_custom_call.1} parent=1 // pred_check
      _
    $region35: #{tpu_custom_call.1} parent=1 // pred_check_branch
      %79 = sbr.rel (0) target = $region37
    $region36: #{tpu_custom_call.1} parent=1 // pred_region
      %81 = dma.done [#allocation9], 256
    $region37: #{tpu_custom_call.1} parent=1 // pred_fallthru
      _
    %v83 = vld [vmem:[#allocation2] sm:$0xf]
    %v84 = vld [vmem:[#allocation2 + $0x4] sm:$0xf]
    %v85 = vld [vmem:[%s3] sm:$0x1]
    %v86 = vld [vmem:[#allocation7] sm:$0xf]
    %v87 = vld [vmem:[#allocation7 + $0x4] sm:$0xf]
    %v88 = vld [vmem:[#allocation7 + $0x8] sm:$0xf]
    %v89 = vld [vmem:[#allocation7 + $0xc] sm:$0xf]
    %v91 = vperm.slane %v85, 0
    %v95 = vunpack.c.l.b16 %v83
    %v96 = vunpack.c.l.b16 %v84
    %v97 = vpack.c.b16 %v96, %v95
    %v102 = vunpack.c.l.b16 %v86
    %v103 = vunpack.c.l.b16 %v87
    %v104 = vunpack.c.l.b16 %v88
    %v105 = vunpack.c.l.b16 %v89
    %v106 = vpack.c.b16 %v103, %v102
    %v107 = vpack.c.b16 %v105, %v104
    %vm110 = vcmask 261120
    %v112 = vsel %vm110, %v97, 0
    %114 = vmatpush.bf16.msra.mxu0 0
    %115 = vmatpush.bf16.msra.mxu0 0
    %116 = vmatpush.bf16.msra.mxu0 0
    %117 = vmatpush.bf16.msra.mxu0 0
    %118 = vmatpush.bf16.msra.mxu0 0
    %119 = vmatpush.bf16.msra.mxu0 0
    %120 = vmatpush.bf16.msra.mxu0 %v107
    %121 = vmatpush.bf16.msra.mxu0 %v106
    %122 = vmatmul.bf16.gmra.mxu0 %v112
    %v123 = vpop.f32.mrf.mxu0
    %v124 = vadd.f32 %v91, %v123
    %v125 = vpop.f32.mrf.mxu0
    %v126 = vadd.f32 %v91, %v125
    %127 = vdwg.mxu0
    %v128 = vld [vmem:[#allocation5] sm:$0x3]
    %130 = vrot.lane.b32.xlu0 %v124, 96
    %v131 = vpop.permute.xlu0 %130
    %133 = vxpose.xlu0.b32.start [1/16] %v131, 128
    %134 = vxpose.xlu0.b32.cont [2/16] 0.0, 128
    %135 = vxpose.xlu0.b32.cont [3/16] 0.0, 128
    %136 = vxpose.xlu0.b32.cont [4/16] 0.0, 128
    %137 = vxpose.xlu0.b32.cont [5/16] 0.0, 128
    %138 = vxpose.xlu0.b32.cont [6/16] 0.0, 128
    %139 = vxpose.xlu0.b32.cont [7/16] 0.0, 128
    %140 = vxpose.xlu0.b32.cont [8/16] 0.0, 128
    %141 = vxpose.xlu0.b32.cont [9/16] 0.0, 128
    %142 = vxpose.xlu0.b32.cont [10/16] 0.0, 128
    %143 = vxpose.xlu0.b32.cont [11/16] 0.0, 128
    %144 = vxpose.xlu0.b32.cont [12/16] 0.0, 128
    %145 = vxpose.xlu0.b32.cont [13/16] 0.0, 128
    %146 = vxpose.xlu0.b32.cont [14/16] 0.0, 128
    %147 = vxpose.xlu0.b32.cont [15/16] 0.0, 128
    %148 = vxpose.xlu0.b32.end [16/16] 0.0, 128
    %v149 = vpop.trf.xlu0
    %v150 = vpop.trf.xlu0
    %v151 = vpop.trf.xlu0
    %v152 = vpop.trf.xlu0
    %v153 = vpop.trf.xlu0
    %v154 = vpop.trf.xlu0
    %v155 = vpop.trf.xlu0
    %v156 = vpop.trf.xlu0
    %v157 = vpop.trf.xlu0
    %v158 = vpop.trf.xlu0
    %v159 = vpop.trf.xlu0
    %v160 = vpop.trf.xlu0
    %v161 = vpop.trf.xlu0
    %v162 = vpop.trf.xlu0
    %v163 = vpop.trf.xlu0
    %v164 = vpop.trf.xlu0
    %v165 = vpack.c.bf16 %v149, %v149
    %v166 = vpack.c.bf16 %v150, %v150
    %v167 = vpack.c.bf16 %v151, %v151
    %v168 = vpack.c.bf16 %v152, %v152
    %v169 = vpack.c.bf16 %v124, %v124
    %v170 = vperm.slane %v128, 0
    %vm171 = vcmask 64512
    %v173 = vsel %vm171, %v169, 0
    %vm175 = vcmask 1043456
    %v177 = vsel %vm175, %v165, 0
    %179 = vmatpush.bf16.msra.mxu0 0
    %180 = vmatpush.bf16.msra.mxu0 0
    %181 = vmatpush.bf16.msra.mxu0 0
    %182 = vmatpush.bf16.msra.mxu0 0
    %183 = vmatpush.bf16.msra.mxu0 0
    %184 = vmatpush.bf16.msra.mxu0 0
    %185 = vmatpush.bf16.msra.mxu0 0
    %186 = vmatpush.bf16.msra.mxu0 %v177
    %187 = vmatmul.bf16.gmra.mxu0 %v173
    %v188 = vpop.f32.mrf.mxu0
    %v189 = vadd.f32 0.0, %v188
    %v190 = vpop.f32.mrf.mxu0
    %191 = vdwg.mxu0
    %v192 = vmul.f32 %v189, %v170
    %v193 = vsel %vm171, %v192, -inf
    %194 = vmax.xlane.f32.xlu0 %v193
    %v195 = vpop.xlane.xlu0 %194
    %v196 = vsub.f32 %v192, %v195
    %v197 = vmul.f32 %v196, 1.442695
    %v198 = vpow.pop %v197
    %v199 = vmul.f32 %v198, %v170
    %v200 = vsel %vm171, %v199, 0.0
    %201 = vadd.xlane.f32.xlu0 %v200
    %v202 = vpop.xlane.xlu0 %201
    %v203 = vsel %vm171, %v198, 0.0
    %204 = vadd.xlane.f32.xlu0 %v203
    %v205 = vpop.xlane.xlu0 %204
    %v206 = vmul.f32 %v205, 1e-13
    %v207 = vadd.f32 %v202, %v206
    %v208 = vrcp.pop %v207
    %v209 = vmul.f32 %v199, %v208
    %v210 = vpack.c.bf16 %v209, %v209
    %v212 = vunpack.c.l.b16 %v169
    %v213 = vpack.c.b16 %v212, %v212
    %214 = vrot.lane.b32.xlu0 %v213, 64
    %v215 = vpop.permute.xlu0 %214
    %v217 = vsel %vm171, %v210, 0
    %v220 = vsel %vm175, %v215, 0
    %222 = vmatpush.bf16.msra.mxu0 0
    %223 = vmatpush.bf16.msra.mxu0 0
    %224 = vmatpush.bf16.msra.mxu0 0
    %225 = vmatpush.bf16.msra.mxu0 0
    %226 = vmatpush.bf16.msra.mxu0 0
    %227 = vmatpush.bf16.msra.mxu0 0
    %228 = vmatpush.bf16.msra.mxu0 0
    %229 = vmatpush.bf16.msra.mxu0 %v220
    %230 = vmatmul.bf16.gmra.mxu0 %v217
    %v231 = vpop.f32.mrf.mxu0
    %v232 = vadd.f32 0.0, %v231
    %v233 = vpop.f32.mrf.mxu0
    %234 = vdwg.mxu0
    %235 = vrot.lane.b32.xlu0 %v213, 120
    %v236 = vpop.permute.xlu0 %235
    %v238 = vsel %vm171, %v236, 0
    %v241 = vsel %vm175, %v166, 0
    %243 = vmatpush.bf16.msra.mxu0 0
    %244 = vmatpush.bf16.msra.mxu0 0
    %245 = vmatpush.bf16.msra.mxu0 0
    %246 = vmatpush.bf16.msra.mxu0 0
    %247 = vmatpush.bf16.msra.mxu0 0
    %248 = vmatpush.bf16.msra.mxu0 0
    %249 = vmatpush.bf16.msra.mxu0 0
    %250 = vmatpush.bf16.msra.mxu0 %v241
    %251 = vmatmul.bf16.gmra.mxu0 %v238
    %v252 = vpop.f32.mrf.mxu0
    %v253 = vadd.f32 0.0, %v252
    %v254 = vpop.f32.mrf.mxu0
    %255 = vdwg.mxu0
    %v256 = vmul.f32 %v253, %v170
    %v257 = vsel %vm171, %v256, -inf
    %258 = vmax.xlane.f32.xlu0 %v257
    %v259 = vpop.xlane.xlu0 %258
    %v260 = vsub.f32 %v256, %v259
    %v261 = vmul.f32 %v260, 1.442695
    %v262 = vpow.pop %v261
    %v263 = vmul.f32 %v262, %v170
    %v264 = vsel %vm171, %v263, 0.0
    %265 = vadd.xlane.f32.xlu0 %v264
    %v266 = vpop.xlane.xlu0 %265
    %v267 = vsel %vm171, %v262, 0.0
    %268 = vadd.xlane.f32.xlu0 %v267
    %v269 = vpop.xlane.xlu0 %268
    %v270 = vmul.f32 %v269, 1e-13
    %v271 = vadd.f32 %v266, %v270
    %v272 = vrcp.pop %v271
    %v273 = vmul.f32 %v263, %v272
    %v274 = vpack.c.bf16 %v273, %v273
    %275 = vrot.lane.b32.xlu0 %v213, 56
    %v276 = vpop.permute.xlu0 %275
    %v278 = vsel %vm171, %v274, 0
    %v281 = vsel %vm175, %v276, 0
    %283 = vmatpush.bf16.msra.mxu0 0
    %284 = vmatpush.bf16.msra.mxu0 0
    %285 = vmatpush.bf16.msra.mxu0 0
    %286 = vmatpush.bf16.msra.mxu0 0
    %287 = vmatpush.bf16.msra.mxu0 0
    %288 = vmatpush.bf16.msra.mxu0 0
    %289 = vmatpush.bf16.msra.mxu0 0
    %290 = vmatpush.bf16.msra.mxu0 %v281
    %291 = vmatmul.bf16.gmra.mxu0 %v278
    %v292 = vpop.f32.mrf.mxu0
    %v293 = vadd.f32 0.0, %v292
    %v294 = vpop.f32.mrf.mxu0
    %295 = vdwg.mxu0
    %296 = vrot.lane.b32.xlu0 %v213, 112
    %v297 = vpop.permute.xlu0 %296
    %v299 = vsel %vm171, %v297, 0
    %v302 = vsel %vm175, %v167, 0
    %304 = vmatpush.bf16.msra.mxu0 0
    %305 = vmatpush.bf16.msra.mxu0 0
    %306 = vmatpush.bf16.msra.mxu0 0
    %307 = vmatpush.bf16.msra.mxu0 0
    %308 = vmatpush.bf16.msra.mxu0 0
    %309 = vmatpush.bf16.msra.mxu0 0
    %310 = vmatpush.bf16.msra.mxu0 0
    %311 = vmatpush.bf16.msra.mxu0 %v302
    %312 = vmatmul.bf16.gmra.mxu0 %v299
    %v313 = vpop.f32.mrf.mxu0
    %v314 = vadd.f32 0.0, %v313
    %v315 = vpop.f32.mrf.mxu0
    %316 = vdwg.mxu0
    %v317 = vmul.f32 %v314, %v170
    %v318 = vsel %vm171, %v317, -inf
    %319 = vmax.xlane.f32.xlu0 %v318
    %v320 = vpop.xlane.xlu0 %319
    %v321 = vsub.f32 %v317, %v320
    %v322 = vmul.f32 %v321, 1.442695
    %v323 = vpow.pop %v322
    %v324 = vmul.f32 %v323, %v170
    %v325 = vsel %vm171, %v324, 0.0
    %326 = vadd.xlane.f32.xlu0 %v325
    %v327 = vpop.xlane.xlu0 %326
    %v328 = vsel %vm171, %v323, 0.0
    %329 = vadd.xlane.f32.xlu0 %v328
    %v330 = vpop.xlane.xlu0 %329
    %v331 = vmul.f32 %v330, 1e-13
    %v332 = vadd.f32 %v327, %v331
    %v333 = vrcp.pop %v332
    %v334 = vmul.f32 %v324, %v333
    %v335 = vpack.c.bf16 %v334, %v334
    %336 = vrot.lane.b32.xlu0 %v213, 48
    %v337 = vpop.permute.xlu0 %336
    %v339 = vsel %vm171, %v335, 0
    %v342 = vsel %vm175, %v337, 0
    %344 = vmatpush.bf16.msra.mxu0 0
    %345 = vmatpush.bf16.msra.mxu0 0
    %346 = vmatpush.bf16.msra.mxu0 0
    %347 = vmatpush.bf16.msra.mxu0 0
    %348 = vmatpush.bf16.msra.mxu0 0
    %349 = vmatpush.bf16.msra.mxu0 0
    %350 = vmatpush.bf16.msra.mxu0 0
    %351 = vmatpush.bf16.msra.mxu0 %v342
    %352 = vmatmul.bf16.gmra.mxu0 %v339
    %v353 = vpop.f32.mrf.mxu0
    %v354 = vadd.f32 0.0, %v353
    %v355 = vpop.f32.mrf.mxu0
    %356 = vdwg.mxu0
    %357 = vrot.lane.b32.xlu0 %v213, 104
    %v358 = vpop.permute.xlu0 %357
    %v360 = vsel %vm171, %v358, 0
    %v363 = vsel %vm175, %v168, 0
    %365 = vmatpush.bf16.msra.mxu0 0
    %366 = vmatpush.bf16.msra.mxu0 0
    %367 = vmatpush.bf16.msra.mxu0 0
    %368 = vmatpush.bf16.msra.mxu0 0
    %369 = vmatpush.bf16.msra.mxu0 0
    %370 = vmatpush.bf16.msra.mxu0 0
    %371 = vmatpush.bf16.msra.mxu0 0
    %372 = vmatpush.bf16.msra.mxu0 %v363
    %373 = vmatmul.bf16.gmra.mxu0 %v360
    %v374 = vpop.f32.mrf.mxu0
    %v375 = vadd.f32 0.0, %v374
    %v376 = vpop.f32.mrf.mxu0
    %377 = vdwg.mxu0
    %v378 = vmul.f32 %v375, %v170
    %v379 = vsel %vm171, %v378, -inf
    %380 = vmax.xlane.f32.xlu0 %v379
    %v381 = vpop.xlane.xlu0 %380
    %v382 = vsub.f32 %v378, %v381
    %v383 = vmul.f32 %v382, 1.442695
    %v384 = vpow.pop %v383
    %v385 = vmul.f32 %v384, %v170
    %v386 = vsel %vm171, %v385, 0.0
    %387 = vadd.xlane.f32.xlu0 %v386
    %v388 = vpop.xlane.xlu0 %387
    %v389 = vsel %vm171, %v384, 0.0
    %390 = vadd.xlane.f32.xlu0 %v389
    %v391 = vpop.xlane.xlu0 %390
    %v392 = vmul.f32 %v391, 1e-13
    %v393 = vadd.f32 %v388, %v392
    %v394 = vrcp.pop %v393
    %v395 = vmul.f32 %v385, %v394
    %v396 = vpack.c.bf16 %v395, %v395
    %397 = vrot.lane.b32.xlu0 %v213, 40
    %v398 = vpop.permute.xlu0 %397
    %v400 = vsel %vm171, %v396, 0
    %v403 = vsel %vm175, %v398, 0
    %405 = vmatpush.bf16.msra.mxu0 0
    %406 = vmatpush.bf16.msra.mxu0 0
    %407 = vmatpush.bf16.msra.mxu0 0
    %408 = vmatpush.bf16.msra.mxu0 0
    %409 = vmatpush.bf16.msra.mxu0 0
    %410 = vmatpush.bf16.msra.mxu0 0
    %411 = vmatpush.bf16.msra.mxu0 0
    %412 = vmatpush.bf16.msra.mxu0 %v403
    %413 = vmatmul.bf16.gmra.mxu0 %v400
    %v414 = vpop.f32.mrf.mxu0
    %v415 = vadd.f32 0.0, %v414
    %v416 = vpop.f32.mrf.mxu0
    %417 = vdwg.mxu0
    %419 = vrot.lane.b32.xlu0 %v293, 8
    %v420 = vpop.permute.xlu0 %419
    %423 = vrot.lane.b32.xlu0 %v354, 16
    %v424 = vpop.permute.xlu0 %423
    %427 = vrot.lane.b32.xlu0 %v415, 24
    %v428 = vpop.permute.xlu0 %427
    %v430 = vsel %vm171, %v232, %v420
    %vm431 = vcmask 130048
    %v432 = vsel %vm431, %v430, %v424
    %vm433 = vcmask 195584
    %v434 = vsel %vm433, %v432, %v428
    %v435 = vpack.c.bf16 %v434, %v434
    %v436 = vld [vmem:[#allocation8] sm:$0xf]
    %v437 = vld [vmem:[#allocation8 + $0x4] sm:$0xf]
    %v438 = vld [vmem:[#allocation8 + $0x8] sm:$0xf]
    %v439 = vld [vmem:[#allocation8 + $0xc] sm:$0xf]
    %v444 = vunpack.c.l.b16 %v436
    %v445 = vunpack.c.l.b16 %v437
    %v446 = vunpack.c.l.b16 %v438
    %v447 = vunpack.c.l.b16 %v439
    %v448 = vpack.c.b16 %v445, %v444
    %v449 = vpack.c.b16 %v447, %v446
    %452 = vrot.lane.b32.xlu0 %v91, 32
    %v453 = vpop.permute.xlu0 %452
    %v456 = vsel %vm110, %v435, 0
    %458 = vmatpush.bf16.msra.mxu0 0
    %459 = vmatpush.bf16.msra.mxu0 0
    %460 = vmatpush.bf16.msra.mxu0 0
    %461 = vmatpush.bf16.msra.mxu0 0
    %462 = vmatpush.bf16.msra.mxu0 0
    %463 = vmatpush.bf16.msra.mxu0 0
    %464 = vmatpush.bf16.msra.mxu0 %v449
    %465 = vmatpush.bf16.msra.mxu0 %v448
    %466 = vmatmul.bf16.gmra.mxu0 %v456
    %v467 = vpop.f32.mrf.mxu0
    %v468 = vadd.f32 %v453, %v467
    %v469 = vpop.f32.mrf.mxu0
    %470 = vdwg.mxu0
    %471 = vst.msk [vmem:[#allocation10] sm:$0xff] %vm110, %v468
    %473 = vrot.lane.b32.xlu0 %v126, 96
    %v474 = vpop.permute.xlu0 %473
    %476 = vxpose.xlu0.b32.start [1/16] %v474, 128
    %477 = vxpose.xlu0.b32.cont [2/16] 0.0, 128
    %478 = vxpose.xlu0.b32.cont [3/16] 0.0, 128
    %479 = vxpose.xlu0.b32.cont [4/16] 0.0, 128
    %480 = vxpose.xlu0.b32.cont [5/16] 0.0, 128
    %481 = vxpose.xlu0.b32.cont [6/16] 0.0, 128
    %482 = vxpose.xlu0.b32.cont [7/16] 0.0, 128
    %483 = vxpose.xlu0.b32.cont [8/16] 0.0, 128
    %484 = vxpose.xlu0.b32.cont [9/16] 0.0, 128
    %485 = vxpose.xlu0.b32.cont [10/16] 0.0, 128
    %486 = vxpose.xlu0.b32.cont [11/16] 0.0, 128
    %487 = vxpose.xlu0.b32.cont [12/16] 0.0, 128
    %488 = vxpose.xlu0.b32.cont [13/16] 0.0, 128
    %489 = vxpose.xlu0.b32.cont [14/16] 0.0, 128
    %490 = vxpose.xlu0.b32.cont [15/16] 0.0, 128
    %491 = vxpose.xlu0.b32.end [16/16] 0.0, 128
    %v492 = vpop.trf.xlu0
    %v493 = vpop.trf.xlu0
    %v494 = vpop.trf.xlu0
    %v495 = vpop.trf.xlu0
    %v496 = vpop.trf.xlu0
    %v497 = vpop.trf.xlu0
    %v498 = vpop.trf.xlu0
    %v499 = vpop.trf.xlu0
    %v500 = vpop.trf.xlu0
    %v501 = vpop.trf.xlu0
    %v502 = vpop.trf.xlu0
    %v503 = vpop.trf.xlu0
    %v504 = vpop.trf.xlu0
    %v505 = vpop.trf.xlu0
    %v506 = vpop.trf.xlu0
    %v507 = vpop.trf.xlu0
    %v508 = vpack.c.bf16 %v492, %v492
    %v509 = vpack.c.bf16 %v493, %v493
    %v510 = vpack.c.bf16 %v494, %v494
    %v511 = vpack.c.bf16 %v495, %v495
    %v512 = vpack.c.bf16 %v126, %v126
    %v513 = vperm.slane %v128, 1
    %v515 = vsel %vm171, %v512, 0
    %v518 = vsel %vm175, %v508, 0
    %520 = vmatpush.bf16.msra.mxu0 0
    %521 = vmatpush.bf16.msra.mxu0 0
    %522 = vmatpush.bf16.msra.mxu0 0
    %523 = vmatpush.bf16.msra.mxu0 0
    %524 = vmatpush.bf16.msra.mxu0 0
    %525 = vmatpush.bf16.msra.mxu0 0
    %526 = vmatpush.bf16.msra.mxu0 0
    %527 = vmatpush.bf16.msra.mxu0 %v518
    %528 = vmatmul.bf16.gmra.mxu0 %v515
    %v529 = vpop.f32.mrf.mxu0
    %v530 = vadd.f32 0.0, %v529
    %v531 = vpop.f32.mrf.mxu0
    %532 = vdwg.mxu0
    %v533 = vmul.f32 %v530, %v513
    %v534 = vsel %vm171, %v533, -inf
    %535 = vmax.xlane.f32.xlu0 %v534
    %v536 = vpop.xlane.xlu0 %535
    %v537 = vsub.f32 %v533, %v536
    %v538 = vmul.f32 %v537, 1.442695
    %v539 = vpow.pop %v538
    %v540 = vmul.f32 %v539, %v513
    %v541 = vsel %vm171, %v540, 0.0
    %542 = vadd.xlane.f32.xlu0 %v541
    %v543 = vpop.xlane.xlu0 %542
    %v544 = vsel %vm171, %v539, 0.0
    %545 = vadd.xlane.f32.xlu0 %v544
    %v546 = vpop.xlane.xlu0 %545
    %v547 = vmul.f32 %v546, 1e-13
    %v548 = vadd.f32 %v543, %v547
    %v549 = vrcp.pop %v548
    %v550 = vmul.f32 %v540, %v549
    %v551 = vpack.c.bf16 %v550, %v550
    %v553 = vunpack.c.l.b16 %v512
    %v554 = vpack.c.b16 %v553, %v553
    %555 = vrot.lane.b32.xlu0 %v554, 64
    %v556 = vpop.permute.xlu0 %555
    %v558 = vsel %vm171, %v551, 0
    %v561 = vsel %vm175, %v556, 0
    %563 = vmatpush.bf16.msra.mxu0 0
    %564 = vmatpush.bf16.msra.mxu0 0
    %565 = vmatpush.bf16.msra.mxu0 0
    %566 = vmatpush.bf16.msra.mxu0 0
    %567 = vmatpush.bf16.msra.mxu0 0
    %568 = vmatpush.bf16.msra.mxu0 0
    %569 = vmatpush.bf16.msra.mxu0 0
    %570 = vmatpush.bf16.msra.mxu0 %v561
    %571 = vmatmul.bf16.gmra.mxu0 %v558
    %v572 = vpop.f32.mrf.mxu0
    %v573 = vadd.f32 0.0, %v572
    %v574 = vpop.f32.mrf.mxu0
    %575 = vdwg.mxu0
    %576 = vrot.lane.b32.xlu0 %v554, 120
    %v577 = vpop.permute.xlu0 %576
    %v579 = vsel %vm171, %v577, 0
    %v582 = vsel %vm175, %v509, 0
    %584 = vmatpush.bf16.msra.mxu0 0
    %585 = vmatpush.bf16.msra.mxu0 0
    %586 = vmatpush.bf16.msra.mxu0 0
    %587 = vmatpush.bf16.msra.mxu0 0
    %588 = vmatpush.bf16.msra.mxu0 0
    %589 = vmatpush.bf16.msra.mxu0 0
    %590 = vmatpush.bf16.msra.mxu0 0
    %591 = vmatpush.bf16.msra.mxu0 %v582
    %592 = vmatmul.bf16.gmra.mxu0 %v579
    %v593 = vpop.f32.mrf.mxu0
    %v594 = vadd.f32 0.0, %v593
    %v595 = vpop.f32.mrf.mxu0
    %596 = vdwg.mxu0
    %v597 = vmul.f32 %v594, %v513
    %v598 = vsel %vm171, %v597, -inf
    %599 = vmax.xlane.f32.xlu0 %v598
    %v600 = vpop.xlane.xlu0 %599
    %v601 = vsub.f32 %v597, %v600
    %v602 = vmul.f32 %v601, 1.442695
    %v603 = vpow.pop %v602
    %v604 = vmul.f32 %v603, %v513
    %v605 = vsel %vm171, %v604, 0.0
    %606 = vadd.xlane.f32.xlu0 %v605
    %v607 = vpop.xlane.xlu0 %606
    %v608 = vsel %vm171, %v603, 0.0
    %609 = vadd.xlane.f32.xlu0 %v608
    %v610 = vpop.xlane.xlu0 %609
    %v611 = vmul.f32 %v610, 1e-13
    %v612 = vadd.f32 %v607, %v611
    %v613 = vrcp.pop %v612
    %v614 = vmul.f32 %v604, %v613
    %v615 = vpack.c.bf16 %v614, %v614
    %616 = vrot.lane.b32.xlu0 %v554, 56
    %v617 = vpop.permute.xlu0 %616
    %v619 = vsel %vm171, %v615, 0
    %v622 = vsel %vm175, %v617, 0
    %624 = vmatpush.bf16.msra.mxu0 0
    %625 = vmatpush.bf16.msra.mxu0 0
    %626 = vmatpush.bf16.msra.mxu0 0
    %627 = vmatpush.bf16.msra.mxu0 0
    %628 = vmatpush.bf16.msra.mxu0 0
    %629 = vmatpush.bf16.msra.mxu0 0
    %630 = vmatpush.bf16.msra.mxu0 0
    %631 = vmatpush.bf16.msra.mxu0 %v622
    %632 = vmatmul.bf16.gmra.mxu0 %v619
    %v633 = vpop.f32.mrf.mxu0
    %v634 = vadd.f32 0.0, %v633
    %v635 = vpop.f32.mrf.mxu0
    %636 = vdwg.mxu0
    %637 = vrot.lane.b32.xlu0 %v554, 112
    %v638 = vpop.permute.xlu0 %637
    %v640 = vsel %vm171, %v638, 0
    %v643 = vsel %vm175, %v510, 0
    %645 = vmatpush.bf16.msra.mxu0 0
    %646 = vmatpush.bf16.msra.mxu0 0
    %647 = vmatpush.bf16.msra.mxu0 0
    %648 = vmatpush.bf16.msra.mxu0 0
    %649 = vmatpush.bf16.msra.mxu0 0
    %650 = vmatpush.bf16.msra.mxu0 0
    %651 = vmatpush.bf16.msra.mxu0 0
    %652 = vmatpush.bf16.msra.mxu0 %v643
    %653 = vmatmul.bf16.gmra.mxu0 %v640
    %v654 = vpop.f32.mrf.mxu0
    %v655 = vadd.f32 0.0, %v654
    %v656 = vpop.f32.mrf.mxu0
    %657 = vdwg.mxu0
    %v658 = vmul.f32 %v655, %v513
    %v659 = vsel %vm171, %v658, -inf
    %660 = vmax.xlane.f32.xlu0 %v659
    %v661 = vpop.xlane.xlu0 %660
    %v662 = vsub.f32 %v658, %v661
    %v663 = vmul.f32 %v662, 1.442695
    %v664 = vpow.pop %v663
    %v665 = vmul.f32 %v664, %v513
    %v666 = vsel %vm171, %v665, 0.0
    %667 = vadd.xlane.f32.xlu0 %v666
    %v668 = vpop.xlane.xlu0 %667
    %v669 = vsel %vm171, %v664, 0.0
    %670 = vadd.xlane.f32.xlu0 %v669
    %v671 = vpop.xlane.xlu0 %670
    %v672 = vmul.f32 %v671, 1e-13
    %v673 = vadd.f32 %v668, %v672
    %v674 = vrcp.pop %v673
    %v675 = vmul.f32 %v665, %v674
    %v676 = vpack.c.bf16 %v675, %v675
    %677 = vrot.lane.b32.xlu0 %v554, 48
    %v678 = vpop.permute.xlu0 %677
    %v680 = vsel %vm171, %v676, 0
    %v683 = vsel %vm175, %v678, 0
    %685 = vmatpush.bf16.msra.mxu0 0
    %686 = vmatpush.bf16.msra.mxu0 0
    %687 = vmatpush.bf16.msra.mxu0 0
    %688 = vmatpush.bf16.msra.mxu0 0
    %689 = vmatpush.bf16.msra.mxu0 0
    %690 = vmatpush.bf16.msra.mxu0 0
    %691 = vmatpush.bf16.msra.mxu0 0
    %692 = vmatpush.bf16.msra.mxu0 %v683
    %693 = vmatmul.bf16.gmra.mxu0 %v680
    %v694 = vpop.f32.mrf.mxu0
    %v695 = vadd.f32 0.0, %v694
    %v696 = vpop.f32.mrf.mxu0
    %697 = vdwg.mxu0
    %698 = vrot.lane.b32.xlu0 %v554, 104
    %v699 = vpop.permute.xlu0 %698
    %v701 = vsel %vm171, %v699, 0
    %v704 = vsel %vm175, %v511, 0
    %706 = vmatpush.bf16.msra.mxu0 0
    %707 = vmatpush.bf16.msra.mxu0 0
    %708 = vmatpush.bf16.msra.mxu0 0
    %709 = vmatpush.bf16.msra.mxu0 0
    %710 = vmatpush.bf16.msra.mxu0 0
    %711 = vmatpush.bf16.msra.mxu0 0
    %712 = vmatpush.bf16.msra.mxu0 0
    %713 = vmatpush.bf16.msra.mxu0 %v704
    %714 = vmatmul.bf16.gmra.mxu0 %v701
    %v715 = vpop.f32.mrf.mxu0
    %v716 = vadd.f32 0.0, %v715
    %v717 = vpop.f32.mrf.mxu0
    %718 = vdwg.mxu0
    %v719 = vmul.f32 %v716, %v513
    %v720 = vsel %vm171, %v719, -inf
    %721 = vmax.xlane.f32.xlu0 %v720
    %v722 = vpop.xlane.xlu0 %721
    %v723 = vsub.f32 %v719, %v722
    %v724 = vmul.f32 %v723, 1.442695
    %v725 = vpow.pop %v724
    %v726 = vmul.f32 %v725, %v513
    %v727 = vsel %vm171, %v726, 0.0
    %728 = vadd.xlane.f32.xlu0 %v727
    %v729 = vpop.xlane.xlu0 %728
    %v730 = vsel %vm171, %v725, 0.0
    %731 = vadd.xlane.f32.xlu0 %v730
    %v732 = vpop.xlane.xlu0 %731
    %v733 = vmul.f32 %v732, 1e-13
    %v734 = vadd.f32 %v729, %v733
    %v735 = vrcp.pop %v734
    %v736 = vmul.f32 %v726, %v735
    %v737 = vpack.c.bf16 %v736, %v736
    %738 = vrot.lane.b32.xlu0 %v554, 40
    %v739 = vpop.permute.xlu0 %738
    %v741 = vsel %vm171, %v737, 0
    %v744 = vsel %vm175, %v739, 0
    %746 = vmatpush.bf16.msra.mxu0 0
    %747 = vmatpush.bf16.msra.mxu0 0
    %748 = vmatpush.bf16.msra.mxu0 0
    %749 = vmatpush.bf16.msra.mxu0 0
    %750 = vmatpush.bf16.msra.mxu0 0
    %751 = vmatpush.bf16.msra.mxu0 0
    %752 = vmatpush.bf16.msra.mxu0 0
    %753 = vmatpush.bf16.msra.mxu0 %v744
    %754 = vmatmul.bf16.gmra.mxu0 %v741
    %v755 = vpop.f32.mrf.mxu0
    %v756 = vadd.f32 0.0, %v755
    %v757 = vpop.f32.mrf.mxu0
    %758 = vdwg.mxu0
    %760 = vrot.lane.b32.xlu0 %v634, 8
    %v761 = vpop.permute.xlu0 %760
    %764 = vrot.lane.b32.xlu0 %v695, 16
    %v765 = vpop.permute.xlu0 %764
    %768 = vrot.lane.b32.xlu0 %v756, 24
    %v769 = vpop.permute.xlu0 %768
    %v771 = vsel %vm171, %v573, %v761
    %v772 = vsel %vm431, %v771, %v765
    %v773 = vsel %vm433, %v772, %v769
    %v774 = vpack.c.bf16 %v773, %v773
    %v775 = vld [vmem:[#allocation8] sm:$0xf]
    %v776 = vld [vmem:[#allocation8 + $0x4] sm:$0xf]
    %v777 = vld [vmem:[#allocation8 + $0x8] sm:$0xf]
    %v778 = vld [vmem:[#allocation8 + $0xc] sm:$0xf]
    %v783 = vunpack.c.l.b16 %v775
    %v784 = vunpack.c.l.b16 %v776
    %v785 = vunpack.c.l.b16 %v777
    %v786 = vunpack.c.l.b16 %v778
    %v787 = vpack.c.b16 %v784, %v783
    %v788 = vpack.c.b16 %v786, %v785
    %v792 = vsel %vm110, %v774, 0
    %794 = vmatpush.bf16.msra.mxu0 0
    %795 = vmatpush.bf16.msra.mxu0 0
    %796 = vmatpush.bf16.msra.mxu0 0
    %797 = vmatpush.bf16.msra.mxu0 0
    %798 = vmatpush.bf16.msra.mxu0 0
    %799 = vmatpush.bf16.msra.mxu0 0
    %800 = vmatpush.bf16.msra.mxu0 %v788
    %801 = vmatpush.bf16.msra.mxu0 %v787
    %802 = vmatmul.bf16.gmra.mxu0 %v792
    %v803 = vpop.f32.mrf.mxu0
    %v804 = vadd.f32 %v453, %v803
    %v805 = vpop.f32.mrf.mxu0
    %806 = vdwg.mxu0
    %s807 = scalar_lea.vmem [#allocation10], 8
    %808 = vst.msk [vmem:[%s807] sm:$0xff] %vm110, %v804
    // Predicated region
    $region38: #{tpu_custom_call.1} parent=1 // pred_check
      _
    $region39: #{tpu_custom_call.1} parent=1 // pred_check_branch
      %810 = sbr.rel (0) target = $region41
    $region40: #{tpu_custom_call.1} parent=1 // pred_region
      %812 = vsyncadd [#allocation4], 0
      %s813 = sshll.u32 [#allocation10], 4
      %s814 = int_to_ptr.vmem [resolvable:$true] %s813
      %s815 = sshll.u32 %s5, 4
      %s816 = int_to_ptr.hbm [resolvable:$true] %s815
      %821 = dma.vmem_to_hbm [thread:$0]  %s814, 256, %s816, [#allocation4], 128, 128, 8
    $region41: #{tpu_custom_call.1} parent=1 // pred_fallthru
      _
    // Predicated region
    $region42: #{tpu_custom_call.1} parent=1 // pred_check
      _
    $region43: #{tpu_custom_call.1} parent=1 // pred_check_branch
      %823 = sbr.rel (0) target = $region45
    $region44: #{tpu_custom_call.1} parent=1 // pred_region
      %825 = dma.done [#allocation4], 256
    $region45: #{tpu_custom_call.1} parent=1 // pred_fallthru
      _
    %826 = vsyncpa [#allocation3], 1
    %827 = vsyncpa [#allocation6], 1
    %828 = vsyncpa [#allocation9], 1
    %829 = vsyncpa [#allocation4], 1

</llo_original>
